<compile_context>
chip_gen: v7x
topology: tpu7x:2x2x1
jax: 0.10.0
libtpu: 0.0.40
codegen_flags: <defaults>
</compile_context>

<pallas_src>
import jax
import jax.numpy as jnp
from jax.experimental import pallas as pl
from jax.experimental.pallas import tpu as pltpu


def _chain_kernel(x_ref, p_ref, o_ref):
    # x_ref: (TR, TL) activation tile (rows = flattened N*C, lanes = H*W tile)
    # p_ref: (TR, 4) per-row folded params [a, b, c, d]
    x = x_ref[...]
    a = p_ref[:, 0:1]
    b = p_ref[:, 1:2]
    c = p_ref[:, 2:3]
    d = p_ref[:, 3:4]

    # 1) StandardScaler folded to a single FMA: (x - mean)/std == x*a + b
    y = x * a + b

    # 2) SymLog: sign(y) * log1p(|y|)  (log1p rides the EUP slot; sign is one
    #    compare + select on the VPU).
    ly = jnp.log1p(jnp.abs(y))
    y = jnp.where(y < 0, -ly, ly)

    # 3) MinMaxScaler folded to a single FMA: (y - mn)/(mx - mn) == y*c + d
    o_ref[...] = (y * c + d).astype(o_ref.dtype)


def _pick_tile(dim, target, quantum):
    """Largest tile <= target that divides `dim` and is a multiple of `quantum`,
    or the full extent (always legal: block dim == array dim)."""
    if dim <= target:
        return dim
    t = (target // quantum) * quantum
    while t >= quantum:
        if dim % t == 0:
            return t
        t -= quantum
    return dim


@jax.jit
def transformation_chain_forward(x_nchw, mean, std, mn, mx):
    """Apply the fused StandardScaler -> SymLog -> MinMaxScaler chain to NCHW.

    x_nchw: (N, C, H, W) float32
    mean, std, mn, mx: (C,) float32 per-channel "fitted" scaler parameters
    """
    N, C, H, W = x_nchw.shape
    R = N * C          # row axis (sublane direction)
    L = H * W          # lane axis

    # Free, contiguous reshape — no HBM transpose passes.
    x_rows = x_nchw.reshape(R, L)

    # Fold both affine stages into (scale, offset) pairs; expand per-channel
    # params to per-row so the kernel indexes them purely by row tile.
    a = 1.0 / std
    b = -mean / std
    inv_range = 1.0 / (mx - mn)
    c = inv_range
    d = -mn * inv_range
    params = jnp.tile(jnp.stack([a, b, c, d], axis=-1), (N, 1))  # (R, 4)

    # Tile sizes: rows in multiples of 8 (full sublane fill), lanes in
    # multiples of 128 (unmasked lane-dense vst), capped so double-buffered
    # in+out tiles stay well under the scoped-VMEM budget on all chips.
    TR = _pick_tile(R, 128, 8)
    TL = _pick_tile(L, 2048, 128)
    grid = (R // TR, L // TL)

    out_rows = pl.pallas_call(
        _chain_kernel,
        out_shape=jax.ShapeDtypeStruct((R, L), x_rows.dtype),
        grid=grid,
        in_specs=[
            pl.BlockSpec((TR, TL), lambda i, j: (i, j)),
            pl.BlockSpec((TR, 4), lambda i, j: (i, 0)),
        ],
        out_specs=pl.BlockSpec((TR, TL), lambda i, j: (i, j)),
        compiler_params=pltpu.CompilerParams(
            dimension_semantics=("parallel", "parallel"),
        ),
    )(x_rows, params)

    return out_rows.reshape(N, C, H, W)


def _reference(x_nchw, mean, std, mn, mx):
    m = mean.reshape(1, -1, 1, 1)
    s = std.reshape(1, -1, 1, 1)
    lo = mn.reshape(1, -1, 1, 1)
    hi = mx.reshape(1, -1, 1, 1)
    y = (x_nchw - m) / s
    y = jnp.sign(y) * jnp.log1p(jnp.abs(y))
    y = (y - lo) / (hi - lo)
    return y


if __name__ == "__main__":
    key = jax.random.PRNGKey(0)
    kx, km, ks, kmn, kr = jax.random.split(key, 5)

    N, C, H, W = 2, 4, 16, 16
    x = jax.random.normal(kx, (N, C, H, W), dtype=jnp.float32)

    # Deterministic synthetic "fitted" scaler parameters (no checkpoint load).
    mean = jax.random.normal(km, (C,), dtype=jnp.float32) * 0.5
    std = jax.random.uniform(ks, (C,), dtype=jnp.float32, minval=0.5, maxval=2.0)
    mn = jax.random.normal(kmn, (C,), dtype=jnp.float32) - 2.0
    mx = mn + jax.random.uniform(kr, (C,), dtype=jnp.float32, minval=1.0, maxval=4.0)

    out = transformation_chain_forward(x, mean, std, mn, mx)
    out = jax.block_until_ready(out)

    ref = _reference(x, mean, std, mn, mx)
    assert out.shape == (N, C, H, W)
    assert jnp.allclose(out, ref, atol=1e-5, rtol=1e-5), "mismatch vs reference"

    # TODO(synk): chaining *arbitrary* trainable nn.Modules cannot be fused
    # generically; this kernel fuses a concrete StandardScaler -> SymLog ->
    # MinMaxScaler chain with fitted per-channel parameters.
    print("KERNEL_OK")
</pallas_src>

<mosaic_0001>
module attributes {stable_mosaic.version = 11 : i64} {
  func.func @_chain_kernel(%arg0: i32, %arg1: i32, %arg2: memref<8x256xf32, #tpu.memory_space<vmem>>, %arg3: memref<8x4xf32, #tpu.memory_space<vmem>>, %arg4: memref<8x256xf32, #tpu.memory_space<vmem>>) attributes {dimension_semantics = [#tpu.dimension_semantics<parallel>, #tpu.dimension_semantics<parallel>], iteration_bounds = array<i64: 1, 1>, scalar_prefetch = 0 : i64, scratch_operands = 0 : i64, tpu.core_type = #tpu.core_type<tc>, window_params = [{transform_indices = @transform_0, window_bounds = array<i64: 8, 256>}, {transform_indices = @transform_1, window_bounds = array<i64: 8, 4>}, {transform_indices = @transform_2, window_bounds = array<i64: 8, 256>}]} {
    %c0 = arith.constant 0 : index
    %c0_0 = arith.constant 0 : index
    %0 = vector.load %arg2[%c0, %c0_0] : memref<8x256xf32, #tpu.memory_space<vmem>>, vector<8x256xf32>
    %c0_1 = arith.constant 0 : index
    %c0_2 = arith.constant 0 : index
    %1 = vector.load %arg3[%c0_1, %c0_2] : memref<8x4xf32, #tpu.memory_space<vmem>>, vector<8x1xf32>
    %c0_3 = arith.constant 0 : index
    %c1 = arith.constant 1 : index
    %2 = vector.load %arg3[%c0_3, %c1] : memref<8x4xf32, #tpu.memory_space<vmem>>, vector<8x1xf32>
    %c0_4 = arith.constant 0 : index
    %c2 = arith.constant 2 : index
    %3 = vector.load %arg3[%c0_4, %c2] : memref<8x4xf32, #tpu.memory_space<vmem>>, vector<8x1xf32>
    %c0_5 = arith.constant 0 : index
    %c3 = arith.constant 3 : index
    %4 = vector.load %arg3[%c0_5, %c3] : memref<8x4xf32, #tpu.memory_space<vmem>>, vector<8x1xf32>
    %5 = vector.broadcast %1 : vector<8x1xf32> to vector<8x256xf32>
    %6 = arith.mulf %0, %5 : vector<8x256xf32>
    %7 = vector.broadcast %2 : vector<8x1xf32> to vector<8x256xf32>
    %8 = arith.addf %6, %7 : vector<8x256xf32>
    %9 = math.absf %8 : vector<8x256xf32>
    %10 = math.log1p %9 : vector<8x256xf32>
    %cst = arith.constant 0.000000e+00 : f32
    %11 = vector.broadcast %cst : f32 to vector<8x256xf32>
    %12 = arith.cmpf olt, %8, %11 : vector<8x256xf32>
    %cst_6 = arith.constant 0.000000e+00 : f32
    %13 = vector.broadcast %cst_6 : f32 to vector<8x256xf32>
    %14 = arith.subf %13, %10 : vector<8x256xf32>
    %15 = arith.select %12, %14, %10 : vector<8x256xi1>, vector<8x256xf32>
    %16 = vector.broadcast %3 : vector<8x1xf32> to vector<8x256xf32>
    %17 = arith.mulf %15, %16 : vector<8x256xf32>
    %18 = vector.broadcast %4 : vector<8x1xf32> to vector<8x256xf32>
    %19 = arith.addf %17, %18 : vector<8x256xf32>
    %c0_7 = arith.constant 0 : index
    %c0_8 = arith.constant 0 : index
    %20 = vector.load %arg4[%c0_7, %c0_8] : memref<8x256xf32, #tpu.memory_space<vmem>>, vector<8x256xf32>
    tpu.vector_store %arg4[%c0_7, %c0_8], %19 {strides = array<i32>} : memref<8x256xf32, #tpu.memory_space<vmem>>, vector<8x256xf32>,
    return
  }
  func.func @transform_0(%arg0: i32, %arg1: i32) -> (i32, i32) {
    %c0_i32 = arith.constant 0 : i32
    return %arg0, %arg1 : i32, i32
  }
  func.func @transform_1(%arg0: i32, %arg1: i32) -> (i32, i32) {
    %c0_i32 = arith.constant 0 : i32
    %c0_i32_0 = arith.constant 0 : i32
    return %arg0, %c0_i32 : i32, i32
  }
  func.func @transform_2(%arg0: i32, %arg1: i32) -> (i32, i32) {
    %c0_i32 = arith.constant 0 : i32
    return %arg0, %arg1 : i32, i32
  }
}

</mosaic_0001>

<llo_original>
// kernel: transformation_chain_forward.1
$region0: #{transformation_chain_forward.1}
  #allocation0 [shape = 'u32[]', space=smem, size = 0x4, offset = 0x4, fixed_abs, tag = 'smem constant byte address 0x4 - core index']
  #allocation1 [shape = 'u32[144,128]{1,0:T(1,128)}', space=vmem, size = 0x12000, scoped, tag = 'internal scratch']
  %s0 = inlined_call_operand.vmem [shape: f32[8,256], index: 0, kind: input, shape index: {}]
  %s1 = inlined_call_operand.vmem [shape: f32[8,4], index: 1, kind: input, shape index: {}]
  %s2 = inlined_call_operand.vmem [shape: f32[8,256], index: 2, kind: output, shape index: {}]
  %s3 = sld [smem:[#allocation0]]
  $region18: #{transformation_chain_forward.1} parent=0
    _
  %s5 = ssub.s32 1, %s3
  %s6 = scalar_select 0, %s5, %s3
  // Predicated region
  $region2: #{transformation_chain_forward.1} parent=0 // pred_check
    _
  $region3: #{transformation_chain_forward.1} parent=0 // pred_check_branch
    %8 = sbr.rel (0) target = $region5
  $region4: #{transformation_chain_forward.1} parent=0 // pred_region
    _
  $region5: #{transformation_chain_forward.1} parent=0 // pred_fallthru
    _
  // Predicated region
  $region6: #{transformation_chain_forward.1} parent=0 // pred_check
    _
  $region7: #{transformation_chain_forward.1} parent=0 // pred_check_branch
    %10 = sbr.rel (0) target = $region9
  $region8: #{transformation_chain_forward.1} parent=0 // pred_region
    _
  $region9: #{transformation_chain_forward.1} parent=0 // pred_fallthru
    _
  %v11 = vld [vmem:[%s0] sm:$0xff]
  %v12 = vld [vmem:[%s0 + $0x8] sm:$0xff]
  %v13 = vld [vmem:[%s1] sm:$0xff]
  %15 = vset.pattern.permute.xlu0 0
  %16 = vperm.xlu0 %15, %v13
  %v17 = vpop.permute.xlu0 %16
  %v19 = vmul.f32 %v11, %v17
  %v20 = vmul.f32 %v12, %v17
  %21 = vset.pattern.permute.xlu0 1
  %22 = vperm.xlu0 %21, %v13
  %v23 = vpop.permute.xlu0 %22
  %v25 = vadd.f32 %v19, %v23
  %v26 = vadd.f32 %v20, %v23
  %v27 = vand.u32 2147483647, %v25
  %v28 = vand.u32 2147483647, %v26
  %v29 = vadd.f32 %v27, 1.0
  %v30 = vlog2.pop %v29
  %v31 = vmul.f32 %v30, 0.6931472
  %v32 = vmul.f32 -0.5, %v27
  %v33 = vadd.f32 %v32, 1.0
  %v34 = vmul.f32 %v33, %v27
  %v35 = vand.u32 2147483647, %v27
  %vm36 = vcmp.lt.f32.partialorder %v35, 0.0004427343
  %v37 = vsel %vm36, %v34, %v31
  %v38 = vadd.f32 %v28, 1.0
  %v39 = vlog2.pop %v38
  %v40 = vmul.f32 %v39, 0.6931472
  %v41 = vmul.f32 -0.5, %v28
  %v42 = vadd.f32 %v41, 1.0
  %v43 = vmul.f32 %v42, %v28
  %v44 = vand.u32 2147483647, %v28
  %vm45 = vcmp.lt.f32.partialorder %v44, 0.0004427343
  %v46 = vsel %vm45, %v43, %v40
  %vm47 = vcmp.lt.f32.partialorder %v25, 0.0
  %vm48 = vcmp.lt.f32.partialorder %v26, 0.0
  %v49 = vsub.f32 0.0, %v37
  %v50 = vsub.f32 0.0, %v46
  %v51 = vsel %vm47, %v49, %v37
  %v52 = vsel %vm48, %v50, %v46
  %53 = vset.pattern.permute.xlu0 2
  %54 = vperm.xlu0 %53, %v13
  %v55 = vpop.permute.xlu0 %54
  %v57 = vmul.f32 %v51, %v55
  %v58 = vmul.f32 %v52, %v55
  %59 = vset.pattern.permute.xlu0 3
  %60 = vperm.xlu0 %59, %v13
  %v61 = vpop.permute.xlu0 %60
  %v63 = vadd.f32 %v57, %v61
  %v64 = vadd.f32 %v58, %v61
  %65 = vst [vmem:[%s2] sm:$0xff] %v63
  %66 = vst [vmem:[%s2 + $0x8] sm:$0xff] %v64
  // Predicated region
  $region10: #{transformation_chain_forward.1} parent=0 // pred_check
    _
  $region11: #{transformation_chain_forward.1} parent=0 // pred_check_branch
    %68 = sbr.rel (0) target = $region13
  $region12: #{transformation_chain_forward.1} parent=0 // pred_region
    _
  $region13: #{transformation_chain_forward.1} parent=0 // pred_fallthru
    _
  // Predicated region
  $region14: #{transformation_chain_forward.1} parent=0 // pred_check
    _
  $region15: #{transformation_chain_forward.1} parent=0 // pred_check_branch
    %70 = sbr.rel (0) target = $region17
  $region16: #{transformation_chain_forward.1} parent=0 // pred_region
    _
  $region17: #{transformation_chain_forward.1} parent=0 // pred_fallthru
    _

</llo_original>
